<compile_context>
chip_gen: v6e
topology: v6e:2x2x1
jax: 0.10.0
libtpu: 0.0.40
codegen_flags: <defaults>
</compile_context>

<pallas_src>
import functools

import jax
import jax.numpy as jnp
from jax.experimental import pallas as pl
from jax.experimental.pallas import tpu as pltpu


def _max_readout_kernel(seq_ref, out_ref, *, rem, fill):
    """Running max across the node-tile grid axis.

    seq_ref: (1, TN, Fw) input tile (native dtype)
    out_ref: (1, 1, Fw)  resident running-max accumulator
    """
    n_idx = pl.program_id(1)
    x = seq_ref[0]                                   # (TN, Fw)

    if rem:  # static: TN does not divide N_rows -> mask the ragged last tile
        last = pl.num_programs(1) - 1
        rows_valid = jnp.where(n_idx == last, rem, x.shape[0])
        row_ids = jax.lax.broadcasted_iota(jnp.int32, x.shape, 0)
        x = jnp.where(row_ids < rows_valid, x, jnp.asarray(fill, x.dtype))

    tile_max = jnp.max(x, axis=0, keepdims=True)     # (1, Fw)

    @pl.when(n_idx == 0)
    def _init():
        out_ref[0] = tile_max

    @pl.when(n_idx > 0)
    def _accumulate():
        out_ref[0] = jnp.maximum(out_ref[0], tile_max)


def max_readout(seq, *, target_tile_bytes=2 * 1024 * 1024):
    """seq: (B, N, F) array. Returns (B, F) = max over axis 1 (same dtype)."""
    B, N, F = seq.shape
    dtype = seq.dtype
    itemsize = jnp.dtype(dtype).itemsize

    # dtype-aware identity element for max (no blanket -inf on ints).
    if jnp.issubdtype(dtype, jnp.floating):
        fill = float("-inf")
    else:
        fill = int(jnp.iinfo(dtype).min)

    # Lane-folding: fold g node rows into the feature dim so lanes are 100%
    # dense (g*F == 128) with zero extra HBM traffic (contiguous reshape).
    if F < 128 and 128 % F == 0 and N % (128 // F) == 0:
        g = 128 // F
    else:
        g = 1
    N_rows = N // g
    Fw = g * F
    seq_folded = seq.reshape(B, N_rows, Fw)

    # Node-tile size chosen by bytes, aligned to the dtype's sublane packing.
    sub = max(8, 32 // itemsize)                 # 8 f32 / 16 bf16 / 32 int8
    row_bytes = Fw * itemsize
    tn = max(1, target_tile_bytes // row_bytes)
    tn = max(sub, (tn // sub) * sub)
    if tn >= N_rows:
        tn = N_rows                              # full extent: one node tile
    n_tiles = pl.cdiv(N_rows, tn)
    rem = N_rows - (n_tiles - 1) * tn
    rem = 0 if rem == tn else rem                # 0 => no in-kernel masking

    kernel = functools.partial(_max_readout_kernel, rem=rem, fill=fill)

    out = pl.pallas_call(
        kernel,
        out_shape=jax.ShapeDtypeStruct((B, 1, Fw), dtype),
        grid_spec=pltpu.PrefetchScalarGridSpec(
            num_scalar_prefetch=0,
            grid=(B, n_tiles),
            in_specs=[pl.BlockSpec((1, tn, Fw), lambda b, n: (b, n, 0))],
            out_specs=pl.BlockSpec((1, 1, Fw), lambda b, n: (b, 0, 0)),
        ),
        compiler_params=pltpu.CompilerParams(
            dimension_semantics=("parallel", "arbitrary")),
    )(seq_folded)

    out = out[:, 0, :]                           # (B, Fw)
    if g > 1:
        out = jnp.max(out.reshape(B, g, F), axis=1)   # tiny finishing reduce
    return out


def max_readout_reference(seq):
    return jnp.max(seq, axis=1)


if __name__ == "__main__":
    key = jax.random.PRNGKey(0)

    # Primary test: shapes consistent with the module's usage
    # (batch of 2 graphs, 16 nodes, hidden size 32).
    B, N, F = 2, 16, 32
    seq = jax.random.normal(key, (B, N, F), dtype=jnp.float32)
    out = jax.block_until_ready(max_readout(seq))
    ref = max_readout_reference(seq)
    assert out.shape == (B, F), out.shape
    assert out.dtype == seq.dtype, out.dtype
    assert jnp.array_equal(out, ref), float(jnp.max(jnp.abs(out - ref)))

    # Secondary tests: exercise the ragged-tile mask, multi-tile accumulation
    # and the native bf16 path (tiny target_tile_bytes forces several tiles).
    k1, k2 = jax.random.split(key)

    seq2 = jax.random.normal(k1, (2, 1000, 48), dtype=jnp.float32)   # no fold
    out2 = jax.block_until_ready(max_readout(seq2, target_tile_bytes=4096))
    assert jnp.array_equal(out2, max_readout_reference(seq2))

    seq3 = jax.random.normal(k2, (2, 100, 32), dtype=jnp.float32).astype(
        jnp.bfloat16)                                                 # fold g=4
    out3 = jax.block_until_ready(max_readout(seq3, target_tile_bytes=2048))
    assert out3.dtype == jnp.bfloat16
    assert jnp.array_equal(out3, max_readout_reference(seq3))

    print("KERNEL_OK")
</pallas_src>

<mosaic_0001>
module attributes {stable_mosaic.version = 11 : i64} {
  func.func @_max_readout_kernel(%arg0: i32, %arg1: i32, %arg2: memref<1x4x128xf32, #tpu.memory_space<vmem>>, %arg3: memref<1x1x128xf32, #tpu.memory_space<vmem>>) attributes {dimension_semantics = [#tpu.dimension_semantics<parallel>, #tpu.dimension_semantics<arbitrary>], iteration_bounds = array<i64: 2, 1>, scalar_prefetch = 0 : i64, scratch_operands = 0 : i64, tpu.core_type = #tpu.core_type<tc>, window_params = [{transform_indices = @transform_0, window_bounds = array<i64: 1, 4, 128>}, {transform_indices = @transform_1, window_bounds = array<i64: 1, 1, 128>}]} {
    %c0 = arith.constant 0 : index
    %c0_0 = arith.constant 0 : index
    %c0_1 = arith.constant 0 : index
    %0 = vector.load %arg2[%c0, %c0_0, %c0_1] : memref<1x4x128xf32, #tpu.memory_space<vmem>>, vector<1x4x128xf32>
    %1 = vector.shape_cast %0 : vector<1x4x128xf32> to vector<4x128xf32>
    %cst = arith.constant dense<0xFF800000> : vector<128xf32>
    %2 = vector.multi_reduction <maximumf>, %1, %cst [0] : vector<4x128xf32> to vector<128xf32>
    %3 = vector.shape_cast %2 : vector<128xf32> to vector<1x128xf32>
    %c0_i32 = arith.constant 0 : i32
    %4 = arith.cmpi eq, %arg1, %c0_i32 : i32
    %5 = arith.extui %4 : i1 to i32
    %c0_i32_2 = arith.constant 0 : i32
    %6 = arith.cmpi ne, %5, %c0_i32_2 : i32
    scf.if %6 {
      %c0_5 = arith.constant 0 : index
      %c0_6 = arith.constant 0 : index
      %c0_7 = arith.constant 0 : index
      %10 = vector.load %arg3[%c0_5, %c0_6, %c0_7] : memref<1x1x128xf32, #tpu.memory_space<vmem>>, vector<1x1x128xf32>
      %11 = vector.shape_cast %10 : vector<1x1x128xf32> to vector<1x128xf32>
      %12 = vector.shape_cast %3 : vector<1x128xf32> to vector<1x1x128xf32>
      tpu.vector_store %arg3[%c0_5, %c0_6, %c0_7], %12 {strides = array<i32>} : memref<1x1x128xf32, #tpu.memory_space<vmem>>, vector<1x1x128xf32>,
    } else {
    }
    %c0_i32_3 = arith.constant 0 : i32
    %7 = arith.cmpi sgt, %arg1, %c0_i32_3 : i32
    %8 = arith.extui %7 : i1 to i32
    %c0_i32_4 = arith.constant 0 : i32
    %9 = arith.cmpi ne, %8, %c0_i32_4 : i32
    scf.if %9 {
      %c0_5 = arith.constant 0 : index
      %c0_6 = arith.constant 0 : index
      %c0_7 = arith.constant 0 : index
      %10 = vector.load %arg3[%c0_5, %c0_6, %c0_7] : memref<1x1x128xf32, #tpu.memory_space<vmem>>, vector<1x1x128xf32>
      %11 = vector.shape_cast %10 : vector<1x1x128xf32> to vector<1x128xf32>
      %12 = arith.maximumf %11, %3 : vector<1x128xf32>
      %c0_8 = arith.constant 0 : index
      %c0_9 = arith.constant 0 : index
      %c0_10 = arith.constant 0 : index
      %13 = vector.load %arg3[%c0_8, %c0_9, %c0_10] : memref<1x1x128xf32, #tpu.memory_space<vmem>>, vector<1x1x128xf32>
      %14 = vector.shape_cast %13 : vector<1x1x128xf32> to vector<1x128xf32>
      %15 = vector.shape_cast %12 : vector<1x128xf32> to vector<1x1x128xf32>
      tpu.vector_store %arg3[%c0_8, %c0_9, %c0_10], %15 {strides = array<i32>} : memref<1x1x128xf32, #tpu.memory_space<vmem>>, vector<1x1x128xf32>,
    } else {
    }
    return
  }
  func.func @transform_0(%arg0: i32, %arg1: i32) -> (i32, i32, i32) {
    %c0_i32 = arith.constant 0 : i32
    %c0_i32_0 = arith.constant 0 : i32
    return %arg0, %arg1, %c0_i32 : i32, i32, i32
  }
  func.func @transform_1(%arg0: i32, %arg1: i32) -> (i32, i32, i32) {
    %c0_i32 = arith.constant 0 : i32
    %c0_i32_0 = arith.constant 0 : i32
    %c0_i32_1 = arith.constant 0 : i32
    return %arg0, %c0_i32, %c0_i32_0 : i32, i32, i32
  }
}

</mosaic_0001>

<llo_original>
// kernel: tpu_custom_call.1
$region0: #{tpu_custom_call.1}
  #allocation0 [shape = 'u32[]', space=smem, size = 0x4, offset = 0x4, fixed_abs, tag = 'smem constant byte address 0x4 - core index']
  #allocation1 [shape = 'u32[144,128]{1,0:T(1,128)}', space=vmem, size = 0x12000, scoped, tag = 'internal scratch']
  %s0 = inlined_call_operand.hbm [shape: f32[2,4,128], index: 0, kind: input, shape index: {}]
  %s1 = inlined_call_operand.hbm [shape: f32[2,1,128], index: 1, kind: output, shape index: {}]
  %s2 = sld [smem:[#allocation0]]
  $region49: #{tpu_custom_call.1} parent=0
    _
  %s4 = ssub.s32 1, %s2
  %s5 = scalar_select 0, %s4, %s2
  $region1: #{tpu_custom_call.1} parent=0
    #allocation2 [shape = 'u8[4096]{0}', space=vmem, size = 0x1000, scoped, tag = 'input window, operand 0']
    #allocation3 [shape = 's32[2]{0}', space=sflag, size = 0x8, scoped, tag = 'scoped memory for tpu_custom_call.1']
    #allocation4 [shape = 's32[2]{0}', space=sflag, size = 0x8, scoped, tag = 'scoped memory for tpu_custom_call.1']
    #allocation5 [shape = 'u8[1024]{0}', space=vmem, size = 0x400, scoped, tag = 'output window, operand 0']
    %6 = vsyncpa [#allocation3], 0
    %s7 = scalar_lea.sflag [#allocation3], 1
    %8 = vsyncpa %s7, 0
    %9 = vsyncpa [#allocation4], 0
    %s10 = scalar_lea.sflag [#allocation4], 1
    %11 = vsyncpa %s10, 0
    loop: start=0, step=1, limit=4
    $region2: #{tpu_custom_call.1} parent=1 // loop_pre_header
      _
    $region3: #{tpu_custom_call.1} parent=1 // loop_header
      %s13 = sphi 0, %s17
      %p14 = scmp.ge.s32.totalorder %s13, 4
      %s20 = sphi 0, %s32
      %s21 = sphi 0, %s28
      %s22 = sphi 0, %s20
      %s23 = sphi 0, %s21
      %s24 = sphi 0, %s22
      %s25 = sphi 0, %s23
      %s37 = sphi 0, %s39
      %s40 = sphi 0, %s37
      %s41 = sphi 0, %s40
      %s57 = sphi 0, %s41
      %s63 = sphi 0, %s65
      %s66 = sphi 0, %s63
      %s67 = sphi 0, %s66
      %s83 = sphi 0, %s67
    $region4: #{tpu_custom_call.1} parent=1 // loop_header_branch
      %16 = sbr.rel (%p14) target = $region8
    $region5: #{tpu_custom_call.1} parent=1 // loop_body
      %s18 = ssub.s32 %s13, 1
      %s19 = ssub.s32 %s13, 2
      %s26 = sadd.s32 1, %s21
      %p27 = scmp.ge.s32.totalorder %s26, 1
      %s28 = scalar_select %p27, 0, %s26
      %s29 = sadd.s32 1, %s20
      %s30 = scalar_select %p27, %s29, %s20
      %p31 = scmp.ge.s32.totalorder %s30, 2
      %s32 = scalar_select %p31, 0, %s30
      %s33 = ssub.s32 %s20, %s32
      %s34 = ssub.s32 %s21, %s28
      %s35 = sor.u32 %s33, %s34
      %p36 = scmp.eq.s32.totalorder %s35, 0
      %s38 = sadd.s32 %s37, 1
      %s39 = scalar_select %p36, %s37, %s38
      %p42 = pneg %p36
      %p43 = scmp.eq.s32.totalorder %s13, 1
      %p44 = por %p42, %p43
      %p45 = scmp.ne.s32.totalorder %s37, %s40
      %p46 = scmp.eq.s32.totalorder %s13, 0
      %p47 = por %p45, %p46
      %p48 = scmp.ne.s32.totalorder %s37, %s40
      %p49 = scmp.eq.s32.totalorder %s18, 1
      %p50 = por %p48, %p49
      %p51 = scmp.ne.s32.totalorder %s40, %s41
      %p52 = scmp.eq.s32.totalorder %s18, 0
      %p53 = por %p51, %p52
      %p54 = scmp.ne.s32.totalorder %s40, %s41
      %p55 = scmp.eq.s32.totalorder %s19, 1
      %p56 = por %p54, %p55
      %p58 = scmp.ne.s32.totalorder %s41, %s57
      %p59 = scmp.eq.s32.totalorder %s19, 0
      %p60 = por %p58, %p59
      %s61 = ssub.s32 %s20, %s32
      %p62 = scmp.eq.s32.totalorder %s61, 0
      %s64 = sadd.s32 %s63, 1
      %s65 = scalar_select %p62, %s63, %s64
      %p68 = pneg %p62
      %p69 = scmp.eq.s32.totalorder %s13, 1
      %p70 = por %p68, %p69
      %p71 = scmp.ne.s32.totalorder %s63, %s66
      %p72 = scmp.eq.s32.totalorder %s13, 0
      %p73 = por %p71, %p72
      %p74 = scmp.ne.s32.totalorder %s63, %s66
      %p75 = scmp.eq.s32.totalorder %s18, 1
      %p76 = por %p74, %p75
      %p77 = scmp.ne.s32.totalorder %s66, %s67
      %p78 = scmp.eq.s32.totalorder %s18, 0
      %p79 = por %p77, %p78
      %p80 = scmp.ne.s32.totalorder %s66, %s67
      %p81 = scmp.eq.s32.totalorder %s19, 1
      %p82 = por %p80, %p81
      %p84 = scmp.ne.s32.totalorder %s67, %s83
      %p85 = scmp.eq.s32.totalorder %s19, 0
      %p86 = por %p84, %p85
      %p87 = scmp.le.s32.totalorder 1, %s13
      %p88 = scmp.lt.s32.totalorder %s13, 3
      %p89 = pnand %p87, %p88
      %p90 = pneg %p89
      // Predicated region
      $region9: #{tpu_custom_call.1} parent=5 // pred_check
        _
      $region10: #{tpu_custom_call.1} parent=5 // pred_check_branch
        %92 = sbr.rel (%p89) target = $region12
      $region11: #{tpu_custom_call.1} parent=5 // pred_region
        %s93 = ssub.s32 %s13, 1
      $region12: #{tpu_custom_call.1} parent=5 // pred_fallthru
        _
      %p94 = scmp.lt.s32.totalorder %s13, 2
      // Predicated region
      $region13: #{tpu_custom_call.1} parent=5 // pred_check
        %p95 = pneg %p94
      $region14: #{tpu_custom_call.1} parent=5 // pred_check_branch
        %97 = sbr.rel (%p95) target = $region16
      $region15: #{tpu_custom_call.1} parent=5 // pred_region
        // Predicated region
        $region17: #{tpu_custom_call.1} parent=15 // pred_check
          %p98 = pneg %p47
        $region18: #{tpu_custom_call.1} parent=15 // pred_check_branch
          %100 = sbr.rel (%p98) target = $region20
        $region19: #{tpu_custom_call.1} parent=15 // pred_region
          %s101 = sand.u32 %s37, 1
          %s102 = scalar_lea.sflag [#allocation3], %s101
          %s103 = sand.u32 %s37, 1
          %s104 = smul.addr %s103, 4
          %s105 = scalar_lea.vmem [#allocation2], %s104
          %s107 = ssub.s32 64, 64
          %108 = vsyncadd %s102, %s107
          %s109 = sadd.s32 %s21, %s20
          %s110 = smul.addr %s109, 64
          %s111 = scalar_lea.hbm %s0, %s110
          %s113 = sshll.u32 %s105, 4
          %s114 = int_to_ptr.vmem [resolvable:$true] %s113
          %116 = dma.hbm_to_vmem [thread:$0]  %s111, 64, %s114, %s102
        $region20: #{tpu_custom_call.1} parent=15 // pred_fallthru
          _
      $region16: #{tpu_custom_call.1} parent=5 // pred_fallthru
        _
      %p117 = scmp.le.s32.totalorder 1, %s13
      %p118 = scmp.lt.s32.totalorder %s13, 3
      %p119 = pnand %p117, %p118
      %p120 = pneg %p119
      // Predicated region
      $region21: #{tpu_custom_call.1} parent=5 // pred_check
        _
      $region22: #{tpu_custom_call.1} parent=5 // pred_check_branch
        %122 = sbr.rel (%p119) target = $region24
      $region23: #{tpu_custom_call.1} parent=5 // pred_region
        %s123 = ssub.s32 %s13, 1
        %s124 = sand.u32 %s40, 1
        %s125 = scalar_lea.sflag [#allocation3], %s124
        %s126 = sand.u32 %s40, 1
        %s127 = smul.addr %s126, 4
        %s128 = scalar_lea.vmem [#allocation2], %s127
        // Predicated region
        $region25: #{tpu_custom_call.1} parent=23 // pred_check
          %p129 = pneg %p53
        $region26: #{tpu_custom_call.1} parent=23 // pred_check_branch
          %131 = sbr.rel (%p129) target = $region28
        $region27: #{tpu_custom_call.1} parent=23 // pred_region
          %132 = dma.done %s125, 64
        $region28: #{tpu_custom_call.1} parent=23 // pred_fallthru
          _
        %s133 = sand.u32 %s40, 1
        %s134 = scalar_lea.sflag [#allocation3], %s133
        %s135 = sand.u32 %s40, 1
        %s136 = smul.addr %s135, 4
        %s137 = scalar_lea.vmem [#allocation2], %s136
        %p138 = pneg %p53
        %p139 = pneg %p50
        %p140 = pneg %p79
        %p141 = pneg %p76
        %s142 = sand.u32 %s66, 1
        %s143 = scalar_lea.sflag [#allocation4], %s142
        %s144 = sand.u32 %s66, 1
        %s145 = scalar_lea.vmem [#allocation5], %s144
        %v146 = vld [vmem:[%s128] sm:$0xf]
        %vm147 = vcmask 1043456
        %v148 = vsel %vm147, %v146, -inf
        %v149 = vrot.slane %v148, 4
        %v150 = vmax.f32 %v148, %v149
        %v151 = vrot.slane %v150, 2
        %v152 = vmax.f32 %v150, %v151
        %v153 = vrot.slane %v152, 1
        %v154 = vmax.f32 %v152, %v153
        %p155 = scmp.eq.s32.totalorder %s23, 0
        // Predicated region
        $region29: #{tpu_custom_call.1} parent=23 // pred_check
          %p156 = pneg %p155
        $region30: #{tpu_custom_call.1} parent=23 // pred_check_branch
          %158 = sbr.rel (%p156) target = $region32
        $region31: #{tpu_custom_call.1} parent=23 // pred_region
          %159 = vst [vmem:[%s145] sm:$0x1] %v154
        $region32: #{tpu_custom_call.1} parent=23 // pred_fallthru
          _
        %p160 = scmp.gt.s32.totalorder %s23, 0
        // Predicated region
        $region33: #{tpu_custom_call.1} parent=23 // pred_check
          %p161 = pneg %p160
        $region34: #{tpu_custom_call.1} parent=23 // pred_check_branch
          %163 = sbr.rel (%p161) target = $region36
        $region35: #{tpu_custom_call.1} parent=23 // pred_region
          %v164 = vld [vmem:[%s145] sm:$0x1]
          %v165 = vmax.f32 %v164, %v154
          %166 = vst [vmem:[%s145] sm:$0x1] %v165
        $region36: #{tpu_custom_call.1} parent=23 // pred_fallthru
          _
        %s167 = sand.u32 %s66, 1
        %s168 = scalar_lea.sflag [#allocation4], %s167
        %s169 = sand.u32 %s66, 1
        %s170 = scalar_lea.vmem [#allocation5], %s169
        // Predicated region
        $region37: #{tpu_custom_call.1} parent=23 // pred_check
          %p171 = pneg %p76
        $region38: #{tpu_custom_call.1} parent=23 // pred_check_branch
          %173 = sbr.rel (%p171) target = $region40
        $region39: #{tpu_custom_call.1} parent=23 // pred_region
          %s175 = ssub.s32 16, 16
          %176 = vsyncadd %s168, %s175
          %s177 = smul.addr %s22, 16
          %s178 = scalar_lea.hbm %s1, %s177
          %s180 = sshll.u32 %s170, 4
          %s181 = int_to_ptr.vmem [resolvable:$true] %s180
          %183 = dma.vmem_to_hbm [thread:$0]  %s181, 16, %s178, %s168
        $region40: #{tpu_custom_call.1} parent=23 // pred_fallthru
          _
      $region24: #{tpu_custom_call.1} parent=5 // pred_fallthru
        _
      %p184 = scmp.le.s32.totalorder 2, %s13
      // Predicated region
      $region41: #{tpu_custom_call.1} parent=5 // pred_check
        %p185 = pneg %p184
      $region42: #{tpu_custom_call.1} parent=5 // pred_check_branch
        %187 = sbr.rel (%p185) target = $region44
      $region43: #{tpu_custom_call.1} parent=5 // pred_region
        %s188 = ssub.s32 %s13, 2
        // Predicated region
        $region45: #{tpu_custom_call.1} parent=43 // pred_check
          %p189 = pneg %p82
        $region46: #{tpu_custom_call.1} parent=43 // pred_check_branch
          %191 = sbr.rel (%p189) target = $region48
        $region47: #{tpu_custom_call.1} parent=43 // pred_region
          %s192 = sand.u32 %s67, 1
          %s193 = scalar_lea.sflag [#allocation4], %s192
          %s194 = sand.u32 %s67, 1
          %s195 = scalar_lea.vmem [#allocation5], %s194
          %196 = dma.done %s193, 16
        $region48: #{tpu_custom_call.1} parent=43 // pred_fallthru
          _
      $region44: #{tpu_custom_call.1} parent=5 // pred_fallthru
        _
    $region6: #{tpu_custom_call.1} parent=1 // loop_footer
      %s17 = sadd.s32 1, %s13
    $region7: #{tpu_custom_call.1} parent=1 // loop_footer_branch
      %12 = sbr.rel target = $region3
    $region8: #{tpu_custom_call.1} parent=1 // loop_exit
      _
    %197 = vsyncpa [#allocation3], 1
    %s198 = scalar_lea.sflag [#allocation3], 1
    %199 = vsyncpa %s198, 1
    %200 = vsyncpa [#allocation4], 1
    %s201 = scalar_lea.sflag [#allocation4], 1
    %202 = vsyncpa %s201, 1

</llo_original>
